<compile_context>
chip_gen: v7x
topology: tpu7x:2x2x1
jax: 0.10.0
libtpu: 0.0.40
codegen_flags: <defaults>
</compile_context>

<pallas_src>
import jax
import jax.numpy as jnp
import numpy as np
from jax.experimental import pallas as pl
from jax.experimental.pallas import tpu as pltpu


def _mlp_kernel(x_ref, w1_ref, b1_ref, w2_ref, b2_ref, w3_ref, b3_ref, o_ref):
    # x tile: [TILE_N, 784] bf16; matmul accumulates in f32 on the MXU.
    h1 = jnp.tanh(
        jnp.dot(x_ref[...], w1_ref[...], preferred_element_type=jnp.float32)
        + b1_ref[...]
    )
    # fc2: 50 -> 25, tanh (f32)
    h2 = jnp.tanh(
        jnp.dot(h1, w2_ref[...], preferred_element_type=jnp.float32) + b2_ref[...]
    )
    # fc3: 25 -> 10, tanh (f32)
    h3 = jnp.tanh(
        jnp.dot(h2, w3_ref[...], preferred_element_type=jnp.float32) + b3_ref[...]
    )

    # log_softmax along dim=1 (features), numerically stable.
    m = jnp.max(h3, axis=-1, keepdims=True)
    shifted = h3 - m
    lse = jnp.log(jnp.sum(jnp.exp(shifted), axis=-1, keepdims=True))
    o_ref[...] = (shifted - lse).astype(o_ref.dtype)


def _round_up(v, m):
    return (v + m - 1) // m * m


def net_full_forward(x, w1, b1, w2, b2, w3, b3, *, tile_n=1024):
    """x: [N, 1, 28, 28] (or anything flattenable to [N, 784]) float32."""
    n = x.shape[0]
    d_in = w1.shape[0]
    x2d = x.reshape(n, -1).astype(jnp.float32)
    assert x2d.shape[1] == d_in

    # Batch tile: multiple of 8 (sublane), capped so double-buffered tiles fit
    # well under scoped VMEM on all of v5e / v6e / v7x.
    tile = min(tile_n, _round_up(n, 8))
    n_pad = _round_up(n, tile)
    if n_pad != n:
        x2d = jnp.pad(x2d, ((0, n_pad - n), (0, 0)))

    # bf16 input + first-layer weight halves the dominant HBM read traffic;
    # the MXU still accumulates in f32 (preferred_element_type above).
    x_bf16 = x2d.astype(jnp.bfloat16)
    w1_bf16 = w1.astype(jnp.bfloat16)

    grid = (n_pad // tile,)

    d1, d2, d3 = w1.shape[1], w2.shape[1], w3.shape[1]
    flops = 2 * n_pad * (d_in * d1 + d1 * d2 + d2 * d3)
    transcendentals = n_pad * (d1 + d2 + d3 + d3)  # tanh x3 + exp in softmax
    bytes_accessed = (
        n_pad * d_in * 2               # x (bf16)
        + n_pad * d3 * 4               # output
        + d_in * d1 * 2                # w1 (bf16)
        + (d1 * d2 + d2 * d3) * 4      # w2, w3
        + (d1 + d2 + d3) * 4           # biases
    )

    out = pl.pallas_call(
        _mlp_kernel,
        out_shape=jax.ShapeDtypeStruct((n_pad, d3), jnp.float32),
        grid=grid,
        in_specs=[
            # x: tiled over the batch axis -> pipelined DMA.
            pl.BlockSpec((tile, d_in), lambda i: (i, 0)),
            # Weights / biases: full blocks, constant index -> VMEM-resident.
            pl.BlockSpec(w1_bf16.shape, lambda i: (0, 0)),
            pl.BlockSpec(b1.shape, lambda i: (0, 0)),
            pl.BlockSpec(w2.shape, lambda i: (0, 0)),
            pl.BlockSpec(b2.shape, lambda i: (0, 0)),
            pl.BlockSpec(w3.shape, lambda i: (0, 0)),
            pl.BlockSpec(b3.shape, lambda i: (0, 0)),
        ],
        out_specs=pl.BlockSpec((tile, d3), lambda i: (i, 0)),
        compiler_params=pltpu.CompilerParams(
            dimension_semantics=("parallel",),
        ),
        cost_estimate=pl.CostEstimate(
            flops=flops,
            transcendentals=transcendentals,
            bytes_accessed=bytes_accessed,
        ),
    )(x_bf16, w1_bf16, b1, w2, b2, w3, b3)

    return out[:n]


def _init_params(key):
    """Deterministic init mirroring nn.Linear's uniform(-1/sqrt(fan_in), ...)."""
    dims = [(28 * 28, 50), (50, 25), (25, 10)]
    params = []
    for (fan_in, fan_out) in dims:
        key, kw, kb = jax.random.split(key, 3)
        bound = 1.0 / np.sqrt(fan_in)
        # Weights stored as [fan_in, fan_out] so the kernel computes x @ W + b
        # (equivalent to PyTorch's x @ W.T with W of shape [fan_out, fan_in]).
        w = jax.random.uniform(kw, (fan_in, fan_out), jnp.float32, -bound, bound)
        b = jax.random.uniform(kb, (1, fan_out), jnp.float32, -bound, bound)
        params += [w, b]
    return params


def _reference_f32(x, w1, b1, w2, b2, w3, b3):
    """Pure-f32 reference (exact PyTorch-module semantics)."""
    x2d = x.reshape(x.shape[0], -1)
    h = jnp.tanh(x2d @ w1 + b1)
    h = jnp.tanh(h @ w2 + b2)
    h = jnp.tanh(h @ w3 + b3)
    return jax.nn.log_softmax(h, axis=1)


def _reference_bf16in(x, w1, b1, w2, b2, w3, b3):
    """Reference with the same intentional bf16 input/w1 quantization."""
    x2d = x.reshape(x.shape[0], -1).astype(jnp.bfloat16).astype(jnp.float32)
    w1q = w1.astype(jnp.bfloat16).astype(jnp.float32)
    h = jnp.tanh(x2d @ w1q + b1)
    h = jnp.tanh(h @ w2 + b2)
    h = jnp.tanh(h @ w3 + b3)
    return jax.nn.log_softmax(h, axis=1)


if __name__ == "__main__":
    key = jax.random.PRNGKey(0)
    key, kx = jax.random.split(key)

    # Small MNIST-like batch: [N, 1, 28, 28]
    x = jax.random.normal(kx, (8, 1, 28, 28), jnp.float32)
    w1, b1, w2, b2, w3, b3 = _init_params(key)

    out = net_full_forward(x, w1, b1, w2, b2, w3, b3)
    out = jax.block_until_ready(out)

    # Tight check against a reference with the same bf16 input quantization.
    ref_q = _reference_bf16in(x, w1, b1, w2, b2, w3, b3)
    np.testing.assert_allclose(np.asarray(out), np.asarray(ref_q),
                               atol=1e-3, rtol=1e-3)

    # Semantic check against the pure-f32 module (loosened for the bf16 input).
    ref = _reference_f32(x, w1, b1, w2, b2, w3, b3)
    np.testing.assert_allclose(np.asarray(out), np.asarray(ref),
                               atol=5e-2, rtol=5e-2)

    print("KERNEL_OK")
</pallas_src>

<mosaic_0001>
module attributes {stable_mosaic.version = 11 : i64} {
  func.func @_mlp_kernel(%arg0: i32, %arg1: memref<8x784xbf16, #tpu.memory_space<vmem>>, %arg2: memref<784x50xbf16, #tpu.memory_space<vmem>>, %arg3: memref<1x50xf32, #tpu.memory_space<vmem>>, %arg4: memref<50x25xf32, #tpu.memory_space<vmem>>, %arg5: memref<1x25xf32, #tpu.memory_space<vmem>>, %arg6: memref<25x10xf32, #tpu.memory_space<vmem>>, %arg7: memref<1x10xf32, #tpu.memory_space<vmem>>, %arg8: memref<8x10xf32, #tpu.memory_space<vmem>>) attributes {dimension_semantics = [#tpu.dimension_semantics<parallel>], iteration_bounds = array<i64: 1>, scalar_prefetch = 0 : i64, scratch_operands = 0 : i64, tpu.core_type = #tpu.core_type<tc>, window_params = [{transform_indices = @transform_0, window_bounds = array<i64: 8, 784>}, {pipeline_mode = #tpu.pipeline_mode<synchronous>, transform_indices = @transform_1, window_bounds = array<i64: 784, 50>}, {pipeline_mode = #tpu.pipeline_mode<synchronous>, transform_indices = @transform_2, window_bounds = array<i64: 1, 50>}, {pipeline_mode = #tpu.pipeline_mode<synchronous>, transform_indices = @transform_3, window_bounds = array<i64: 50, 25>}, {pipeline_mode = #tpu.pipeline_mode<synchronous>, transform_indices = @transform_4, window_bounds = array<i64: 1, 25>}, {pipeline_mode = #tpu.pipeline_mode<synchronous>, transform_indices = @transform_5, window_bounds = array<i64: 25, 10>}, {pipeline_mode = #tpu.pipeline_mode<synchronous>, transform_indices = @transform_6, window_bounds = array<i64: 1, 10>}, {transform_indices = @transform_7, window_bounds = array<i64: 8, 10>}]} {
    %c0 = arith.constant 0 : index
    %c0_0 = arith.constant 0 : index
    %0 = vector.load %arg1[%c0, %c0_0] : memref<8x784xbf16, #tpu.memory_space<vmem>>, vector<8x784xbf16>
    %c0_1 = arith.constant 0 : index
    %c0_2 = arith.constant 0 : index
    %1 = vector.load %arg2[%c0_1, %c0_2] : memref<784x50xbf16, #tpu.memory_space<vmem>>, vector<784x50xbf16>
    %cst = arith.constant dense<0.000000e+00> : vector<8x50xf32>
    %2 = tpu.matmul %0, %1, %cst {dimension_numbers = #tpu.dot_dimension_numbers<[1], [0], [0], [1], [0, 0, 1, 1], [], []>} : vector<8x784xbf16>, vector<784x50xbf16>, vector<8x50xf32> -> vector<8x50xf32>
    %c0_3 = arith.constant 0 : index
    %c0_4 = arith.constant 0 : index
    %3 = vector.load %arg3[%c0_3, %c0_4] : memref<1x50xf32, #tpu.memory_space<vmem>>, vector<1x50xf32>
    %4 = vector.broadcast %3 : vector<1x50xf32> to vector<8x50xf32>
    %5 = arith.addf %2, %4 : vector<8x50xf32>
    %6 = math.tanh %5 : vector<8x50xf32>
    %c0_5 = arith.constant 0 : index
    %c0_6 = arith.constant 0 : index
    %7 = vector.load %arg4[%c0_5, %c0_6] : memref<50x25xf32, #tpu.memory_space<vmem>>, vector<50x25xf32>
    %cst_7 = arith.constant dense<0.000000e+00> : vector<8x25xf32>
    %8 = tpu.matmul %6, %7, %cst_7 {dimension_numbers = #tpu.dot_dimension_numbers<[1], [0], [0], [1], [0, 0, 1, 1], [], []>} : vector<8x50xf32>, vector<50x25xf32>, vector<8x25xf32> -> vector<8x25xf32>
    %c0_8 = arith.constant 0 : index
    %c0_9 = arith.constant 0 : index
    %9 = vector.load %arg5[%c0_8, %c0_9] : memref<1x25xf32, #tpu.memory_space<vmem>>, vector<1x25xf32>
    %10 = vector.broadcast %9 : vector<1x25xf32> to vector<8x25xf32>
    %11 = arith.addf %8, %10 : vector<8x25xf32>
    %12 = math.tanh %11 : vector<8x25xf32>
    %c0_10 = arith.constant 0 : index
    %c0_11 = arith.constant 0 : index
    %13 = vector.load %arg6[%c0_10, %c0_11] : memref<25x10xf32, #tpu.memory_space<vmem>>, vector<25x10xf32>
    %cst_12 = arith.constant dense<0.000000e+00> : vector<8x10xf32>
    %14 = tpu.matmul %12, %13, %cst_12 {dimension_numbers = #tpu.dot_dimension_numbers<[1], [0], [0], [1], [0, 0, 1, 1], [], []>} : vector<8x25xf32>, vector<25x10xf32>, vector<8x10xf32> -> vector<8x10xf32>
    %c0_13 = arith.constant 0 : index
    %c0_14 = arith.constant 0 : index
    %15 = vector.load %arg7[%c0_13, %c0_14] : memref<1x10xf32, #tpu.memory_space<vmem>>, vector<1x10xf32>
    %16 = vector.broadcast %15 : vector<1x10xf32> to vector<8x10xf32>
    %17 = arith.addf %14, %16 : vector<8x10xf32>
    %18 = math.tanh %17 : vector<8x10xf32>
    %cst_15 = arith.constant dense<0xFF800000> : vector<8xf32>
    %19 = vector.multi_reduction <maximumf>, %18, %cst_15 [1] : vector<8x10xf32> to vector<8xf32>
    %20 = vector.shape_cast %19 : vector<8xf32> to vector<8x1xf32>
    %21 = vector.broadcast %20 : vector<8x1xf32> to vector<8x10xf32>
    %22 = arith.subf %18, %21 : vector<8x10xf32>
    %23 = math.exp %22 : vector<8x10xf32>
    %cst_16 = arith.constant dense<0.000000e+00> : vector<8xf32>
    %24 = vector.multi_reduction <add>, %23, %cst_16 [1] : vector<8x10xf32> to vector<8xf32>
    %25 = vector.shape_cast %24 : vector<8xf32> to vector<8x1xf32>
    %26 = math.log %25 : vector<8x1xf32>
    %27 = vector.broadcast %26 : vector<8x1xf32> to vector<8x10xf32>
    %28 = arith.subf %22, %27 : vector<8x10xf32>
    %c0_17 = arith.constant 0 : index
    %c0_18 = arith.constant 0 : index
    %29 = vector.load %arg8[%c0_17, %c0_18] : memref<8x10xf32, #tpu.memory_space<vmem>>, vector<8x10xf32>
    tpu.vector_store %arg8[%c0_17, %c0_18], %28 {strides = array<i32>} : memref<8x10xf32, #tpu.memory_space<vmem>>, vector<8x10xf32>,
    return
  }
  func.func @transform_0(%arg0: i32) -> (i32, i32) {
    %c0_i32 = arith.constant 0 : i32
    %c0_i32_0 = arith.constant 0 : i32
    return %arg0, %c0_i32 : i32, i32
  }
  func.func @transform_1(%arg0: i32) -> (i32, i32) {
    %c0_i32 = arith.constant 0 : i32
    %c0_i32_0 = arith.constant 0 : i32
    %c0_i32_1 = arith.constant 0 : i32
    return %c0_i32, %c0_i32_0 : i32, i32
  }
  func.func @transform_2(%arg0: i32) -> (i32, i32) {
    %c0_i32 = arith.constant 0 : i32
    %c0_i32_0 = arith.constant 0 : i32
    %c0_i32_1 = arith.constant 0 : i32
    return %c0_i32, %c0_i32_0 : i32, i32
  }
  func.func @transform_3(%arg0: i32) -> (i32, i32) {
    %c0_i32 = arith.constant 0 : i32
    %c0_i32_0 = arith.constant 0 : i32
    %c0_i32_1 = arith.constant 0 : i32
    return %c0_i32, %c0_i32_0 : i32, i32
  }
  func.func @transform_4(%arg0: i32) -> (i32, i32) {
    %c0_i32 = arith.constant 0 : i32
    %c0_i32_0 = arith.constant 0 : i32
    %c0_i32_1 = arith.constant 0 : i32
    return %c0_i32, %c0_i32_0 : i32, i32
  }
  func.func @transform_5(%arg0: i32) -> (i32, i32) {
    %c0_i32 = arith.constant 0 : i32
    %c0_i32_0 = arith.constant 0 : i32
    %c0_i32_1 = arith.constant 0 : i32
    return %c0_i32, %c0_i32_0 : i32, i32
  }
  func.func @transform_6(%arg0: i32) -> (i32, i32) {
    %c0_i32 = arith.constant 0 : i32
    %c0_i32_0 = arith.constant 0 : i32
    %c0_i32_1 = arith.constant 0 : i32
    return %c0_i32, %c0_i32_0 : i32, i32
  }
  func.func @transform_7(%arg0: i32) -> (i32, i32) {
    %c0_i32 = arith.constant 0 : i32
    %c0_i32_0 = arith.constant 0 : i32
    return %arg0, %c0_i32 : i32, i32
  }
}

</mosaic_0001>

<llo_original>
// kernel: tpu_custom_call.1
$region0: #{tpu_custom_call.1}
  #allocation0 [shape = 'u32[]', space=smem, size = 0x4, offset = 0x4, fixed_abs, tag = 'smem constant byte address 0x4 - core index']
  #allocation1 [shape = 'u32[144,128]{1,0:T(1,128)}', space=vmem, size = 0x12000, scoped, tag = 'internal scratch']
  %s0 = inlined_call_operand.vmem [shape: bf16[8,784], index: 0, kind: input, shape index: {}]
  %s1 = inlined_call_operand.vmem [shape: bf16[784,50], index: 1, kind: input, shape index: {}]
  %s2 = inlined_call_operand.vmem [shape: f32[1,50], index: 2, kind: input, shape index: {}]
  %s3 = inlined_call_operand.vmem [shape: f32[50,25], index: 3, kind: input, shape index: {}]
  %s4 = inlined_call_operand.vmem [shape: f32[1,25], index: 4, kind: input, shape index: {}]
  %s5 = inlined_call_operand.vmem [shape: f32[25,10], index: 5, kind: input, shape index: {}]
  %s6 = inlined_call_operand.vmem [shape: f32[1,10], index: 6, kind: input, shape index: {}]
  %s7 = inlined_call_operand.hbm [shape: f32[8,10], index: 7, kind: output, shape index: {}]
  %s8 = sld [smem:[#allocation0]]
  $region38: #{tpu_custom_call.1} parent=0
    _
  %s10 = ssub.s32 1, %s8
  %s11 = scalar_select 0, %s10, %s8
  $region1: #{tpu_custom_call.1} parent=0
    #allocation2 [shape = 'u8[4096]{0}', space=vmem, size = 0x1000, scoped, tag = 'output window, operand 0, single buffered']
    #allocation3 [shape = 's32[1]{0}', space=sflag, size = 0x4, scoped, tag = 'scoped memory for tpu_custom_call.1']
    %12 = vsyncpa [#allocation3], 0
    // Predicated region
    $region2: #{tpu_custom_call.1} parent=1 // pred_check
      _
    $region3: #{tpu_custom_call.1} parent=1 // pred_check_branch
      %14 = sbr.rel (0) target = $region5
    $region4: #{tpu_custom_call.1} parent=1 // pred_region
      _
    $region5: #{tpu_custom_call.1} parent=1 // pred_fallthru
      _
    // Predicated region
    $region6: #{tpu_custom_call.1} parent=1 // pred_check
      _
    $region7: #{tpu_custom_call.1} parent=1 // pred_check_branch
      %16 = sbr.rel (0) target = $region9
    $region8: #{tpu_custom_call.1} parent=1 // pred_region
      _
    $region9: #{tpu_custom_call.1} parent=1 // pred_fallthru
      _
    // Predicated region
    $region10: #{tpu_custom_call.1} parent=1 // pred_check
      _
    $region11: #{tpu_custom_call.1} parent=1 // pred_check_branch
      %18 = sbr.rel (0) target = $region13
    $region12: #{tpu_custom_call.1} parent=1 // pred_region
      _
    $region13: #{tpu_custom_call.1} parent=1 // pred_fallthru
      _
    // Predicated region
    $region14: #{tpu_custom_call.1} parent=1 // pred_check
      _
    $region15: #{tpu_custom_call.1} parent=1 // pred_check_branch
      %20 = sbr.rel (0) target = $region17
    $region16: #{tpu_custom_call.1} parent=1 // pred_region
      _
    $region17: #{tpu_custom_call.1} parent=1 // pred_fallthru
      _
    // Predicated region
    $region18: #{tpu_custom_call.1} parent=1 // pred_check
      _
    $region19: #{tpu_custom_call.1} parent=1 // pred_check_branch
      %22 = sbr.rel (0) target = $region21
    $region20: #{tpu_custom_call.1} parent=1 // pred_region
      _
    $region21: #{tpu_custom_call.1} parent=1 // pred_fallthru
      _
    // Predicated region
    $region22: #{tpu_custom_call.1} parent=1 // pred_check
      _
    $region23: #{tpu_custom_call.1} parent=1 // pred_check_branch
      %24 = sbr.rel (0) target = $region25
    $region24: #{tpu_custom_call.1} parent=1 // pred_region
      _
    $region25: #{tpu_custom_call.1} parent=1 // pred_fallthru
      _
    // Predicated region
    $region26: #{tpu_custom_call.1} parent=1 // pred_check
      _
    $region27: #{tpu_custom_call.1} parent=1 // pred_check_branch
      %26 = sbr.rel (0) target = $region29
    $region28: #{tpu_custom_call.1} parent=1 // pred_region
      _
    $region29: #{tpu_custom_call.1} parent=1 // pred_fallthru
      _
    %v28 = vld [vmem:[%s0] sm:$0xff]
    %v29 = vld [vmem:[%s0 + $0x8] sm:$0xff]
    %v30 = vld [vmem:[%s0 + $0x10] sm:$0xff]
    %v31 = vld [vmem:[%s0 + $0x18] sm:$0xf]
    %v32 = vld [vmem:[%s1] sm:$0xf]
    %v33 = vld [vmem:[%s1 + $0x4] sm:$0xf]
    %v34 = vld [vmem:[%s1 + $0x8] sm:$0xf]
    %v35 = vld [vmem:[%s1 + $0xc] sm:$0xf]
    %v36 = vld [vmem:[%s1 + $0x10] sm:$0xf]
    %v37 = vld [vmem:[%s1 + $0x14] sm:$0xf]
    %v38 = vld [vmem:[%s1 + $0x18] sm:$0xf]
    %v39 = vld [vmem:[%s1 + $0x1c] sm:$0xf]
    %v40 = vld [vmem:[%s1 + $0x20] sm:$0xf]
    %v41 = vld [vmem:[%s1 + $0x24] sm:$0xf]
    %v42 = vld [vmem:[%s1 + $0x28] sm:$0xf]
    %v43 = vld [vmem:[%s1 + $0x2c] sm:$0xf]
    %v44 = vld [vmem:[%s1 + $0x30] sm:$0xf]
    %v45 = vld [vmem:[%s1 + $0x34] sm:$0xf]
    %v46 = vld [vmem:[%s1 + $0x38] sm:$0xf]
    %v47 = vld [vmem:[%s1 + $0x3c] sm:$0xf]
    %v48 = vld [vmem:[%s1 + $0x40] sm:$0xf]
    %v49 = vld [vmem:[%s1 + $0x44] sm:$0xf]
    %v50 = vld [vmem:[%s1 + $0x48] sm:$0xf]
    %v51 = vld [vmem:[%s1 + $0x4c] sm:$0xf]
    %v52 = vld [vmem:[%s1 + $0x50] sm:$0xf]
    %v53 = vld [vmem:[%s1 + $0x54] sm:$0xf]
    %v54 = vld [vmem:[%s1 + $0x58] sm:$0xf]
    %v55 = vld [vmem:[%s1 + $0x5c] sm:$0xf]
    %v56 = vld [vmem:[%s1 + $0x60] sm:$0xf]
    %v57 = vld [vmem:[%s1 + $0x64] sm:$0xf]
    %v58 = vld [vmem:[%s1 + $0x68] sm:$0xf]
    %v59 = vld [vmem:[%s1 + $0x6c] sm:$0xf]
    %v60 = vld [vmem:[%s1 + $0x70] sm:$0xf]
    %v61 = vld [vmem:[%s1 + $0x74] sm:$0xf]
    %v62 = vld [vmem:[%s1 + $0x78] sm:$0xf]
    %v63 = vld [vmem:[%s1 + $0x7c] sm:$0xf]
    %v64 = vld [vmem:[%s1 + $0x80] sm:$0xf]
    %v65 = vld [vmem:[%s1 + $0x84] sm:$0xf]
    %v66 = vld [vmem:[%s1 + $0x88] sm:$0xf]
    %v67 = vld [vmem:[%s1 + $0x8c] sm:$0xf]
    %v68 = vld [vmem:[%s1 + $0x90] sm:$0xf]
    %v69 = vld [vmem:[%s1 + $0x94] sm:$0xf]
    %v70 = vld [vmem:[%s1 + $0x98] sm:$0xf]
    %v71 = vld [vmem:[%s1 + $0x9c] sm:$0xf]
    %v72 = vld [vmem:[%s1 + $0xa0] sm:$0xf]
    %v73 = vld [vmem:[%s1 + $0xa4] sm:$0xf]
    %v74 = vld [vmem:[%s1 + $0xa8] sm:$0xf]
    %v75 = vld [vmem:[%s1 + $0xac] sm:$0xf]
    %v76 = vld [vmem:[%s1 + $0xb0] sm:$0xf]
    %v77 = vld [vmem:[%s1 + $0xb4] sm:$0xf]
    %v78 = vld [vmem:[%s1 + $0xb8] sm:$0xf]
    %v79 = vld [vmem:[%s1 + $0xbc] sm:$0xf]
    %v80 = vld [vmem:[%s1 + $0xc0] sm:$0xf]
    %v81 = vld [vmem:[%s1 + $0xc4] sm:$0xf]
    %v82 = vld [vmem:[%s1 + $0xc8] sm:$0xf]
    %v83 = vld [vmem:[%s1 + $0xcc] sm:$0xf]
    %v84 = vld [vmem:[%s1 + $0xd0] sm:$0xf]
    %v85 = vld [vmem:[%s1 + $0xd4] sm:$0xf]
    %v86 = vld [vmem:[%s1 + $0xd8] sm:$0xf]
    %v87 = vld [vmem:[%s1 + $0xdc] sm:$0xf]
    %v88 = vld [vmem:[%s1 + $0xe0] sm:$0xf]
    %v89 = vld [vmem:[%s1 + $0xe4] sm:$0xf]
    %v90 = vld [vmem:[%s1 + $0xe8] sm:$0xf]
    %v91 = vld [vmem:[%s1 + $0xec] sm:$0xf]
    %v92 = vld [vmem:[%s1 + $0xf0] sm:$0xf]
    %v93 = vld [vmem:[%s1 + $0xf4] sm:$0xf]
    %v94 = vld [vmem:[%s1 + $0xf8] sm:$0xf]
    %v95 = vld [vmem:[%s1 + $0xfc] sm:$0xf]
    %v96 = vld [vmem:[%s1 + $0x100] sm:$0xf]
    %v97 = vld [vmem:[%s1 + $0x104] sm:$0xf]
    %v98 = vld [vmem:[%s1 + $0x108] sm:$0xf]
    %v99 = vld [vmem:[%s1 + $0x10c] sm:$0xf]
    %v100 = vld [vmem:[%s1 + $0x110] sm:$0xf]
    %v101 = vld [vmem:[%s1 + $0x114] sm:$0xf]
    %v102 = vld [vmem:[%s1 + $0x118] sm:$0xf]
    %v103 = vld [vmem:[%s1 + $0x11c] sm:$0xf]
    %v104 = vld [vmem:[%s1 + $0x120] sm:$0xf]
    %v105 = vld [vmem:[%s1 + $0x124] sm:$0xf]
    %v106 = vld [vmem:[%s1 + $0x128] sm:$0xf]
    %v107 = vld [vmem:[%s1 + $0x12c] sm:$0xf]
    %v108 = vld [vmem:[%s1 + $0x130] sm:$0xf]
    %v109 = vld [vmem:[%s1 + $0x134] sm:$0xf]
    %v110 = vld [vmem:[%s1 + $0x138] sm:$0xf]
    %v111 = vld [vmem:[%s1 + $0x13c] sm:$0xf]
    %v112 = vld [vmem:[%s1 + $0x140] sm:$0xf]
    %v113 = vld [vmem:[%s1 + $0x144] sm:$0xf]
    %v114 = vld [vmem:[%s1 + $0x148] sm:$0xf]
    %v115 = vld [vmem:[%s1 + $0x14c] sm:$0xf]
    %v116 = vld [vmem:[%s1 + $0x150] sm:$0xf]
    %v117 = vld [vmem:[%s1 + $0x154] sm:$0xf]
    %v118 = vld [vmem:[%s1 + $0x158] sm:$0xf]
    %v119 = vld [vmem:[%s1 + $0x15c] sm:$0xf]
    %v120 = vld [vmem:[%s1 + $0x160] sm:$0xf]
    %v121 = vld [vmem:[%s1 + $0x164] sm:$0xf]
    %v122 = vld [vmem:[%s1 + $0x168] sm:$0xf]
    %v123 = vld [vmem:[%s1 + $0x16c] sm:$0xf]
    %v124 = vld [vmem:[%s1 + $0x170] sm:$0xf]
    %v125 = vld [vmem:[%s1 + $0x174] sm:$0xf]
    %v126 = vld [vmem:[%s1 + $0x178] sm:$0xf]
    %v127 = vld [vmem:[%s1 + $0x17c] sm:$0xf]
    %v128 = vld [vmem:[%s1 + $0x180] sm:$0xf]
    %v129 = vld [vmem:[%s1 + $0x184] sm:$0xf]
    %v130 = vld [vmem:[%s2] sm:$0x1]
    %v132 = vlaneseq
    %v133 = vshrl.u32 %v132, 7
    %v134 = vsub.s32 0, %v133
    %v135 = vrot.slane %v130, %v134
    %v141 = vunpack.c.l.b16 %v28
    %v142 = vunpack.c.h.b16 %v28
    %v143 = vunpack.c.l.b16 %v29
    %v144 = vunpack.c.h.b16 %v29
    %v145 = vunpack.c.l.b16 %v30
    %v146 = vunpack.c.h.b16 %v30
    %v147 = vunpack.c.l.b16 %v31
    %v148 = vpack.c.b16 %v141, %v141
    %v149 = vpack.c.b16 %v142, %v142
    %v150 = vpack.c.b16 %v143, %v143
    %v151 = vpack.c.b16 %v144, %v144
    %v152 = vpack.c.b16 %v145, %v145
    %v153 = vpack.c.b16 %v146, %v146
    %v154 = vpack.c.b16 %v147, %v147
    %v259 = vunpack.c.l.b16 %v32
    %v260 = vunpack.c.l.b16 %v33
    %v261 = vunpack.c.l.b16 %v34
    %v262 = vunpack.c.l.b16 %v35
    %v263 = vunpack.c.l.b16 %v36
    %v264 = vunpack.c.l.b16 %v37
    %v265 = vunpack.c.l.b16 %v38
    %v266 = vunpack.c.l.b16 %v39
    %v267 = vunpack.c.l.b16 %v40
    %v268 = vunpack.c.l.b16 %v41
    %v269 = vunpack.c.l.b16 %v42
    %v270 = vunpack.c.l.b16 %v43
    %v271 = vunpack.c.l.b16 %v44
    %v272 = vunpack.c.l.b16 %v45
    %v273 = vunpack.c.l.b16 %v46
    %v274 = vunpack.c.l.b16 %v47
    %v275 = vunpack.c.l.b16 %v48
    %v276 = vunpack.c.l.b16 %v49
    %v277 = vunpack.c.l.b16 %v50
    %v278 = vunpack.c.l.b16 %v51
    %v279 = vunpack.c.l.b16 %v52
    %v280 = vunpack.c.l.b16 %v53
    %v281 = vunpack.c.l.b16 %v54
    %v282 = vunpack.c.l.b16 %v55
    %v283 = vunpack.c.l.b16 %v56
    %v284 = vunpack.c.l.b16 %v57
    %v285 = vunpack.c.l.b16 %v58
    %v286 = vunpack.c.l.b16 %v59
    %v287 = vunpack.c.l.b16 %v60
    %v288 = vunpack.c.l.b16 %v61
    %v289 = vunpack.c.l.b16 %v62
    %v290 = vunpack.c.l.b16 %v63
    %v291 = vunpack.c.l.b16 %v64
    %v292 = vunpack.c.l.b16 %v65
    %v293 = vunpack.c.l.b16 %v66
    %v294 = vunpack.c.l.b16 %v67
    %v295 = vunpack.c.l.b16 %v68
    %v296 = vunpack.c.l.b16 %v69
    %v297 = vunpack.c.l.b16 %v70
    %v298 = vunpack.c.l.b16 %v71
    %v299 = vunpack.c.l.b16 %v72
    %v300 = vunpack.c.l.b16 %v73
    %v301 = vunpack.c.l.b16 %v74
    %v302 = vunpack.c.l.b16 %v75
    %v303 = vunpack.c.l.b16 %v76
    %v304 = vunpack.c.l.b16 %v77
    %v305 = vunpack.c.l.b16 %v78
    %v306 = vunpack.c.l.b16 %v79
    %v307 = vunpack.c.l.b16 %v80
    %v308 = vunpack.c.l.b16 %v81
    %v309 = vunpack.c.l.b16 %v82
    %v310 = vunpack.c.l.b16 %v83
    %v311 = vunpack.c.l.b16 %v84
    %v312 = vunpack.c.l.b16 %v85
    %v313 = vunpack.c.l.b16 %v86
    %v314 = vunpack.c.l.b16 %v87
    %v315 = vunpack.c.l.b16 %v88
    %v316 = vunpack.c.l.b16 %v89
    %v317 = vunpack.c.l.b16 %v90
    %v318 = vunpack.c.l.b16 %v91
    %v319 = vunpack.c.l.b16 %v92
    %v320 = vunpack.c.l.b16 %v93
    %v321 = vunpack.c.l.b16 %v94
    %v322 = vunpack.c.l.b16 %v95
    %v323 = vunpack.c.l.b16 %v96
    %v324 = vunpack.c.l.b16 %v97
    %v325 = vunpack.c.l.b16 %v98
    %v326 = vunpack.c.l.b16 %v99
    %v327 = vunpack.c.l.b16 %v100
    %v328 = vunpack.c.l.b16 %v101
    %v329 = vunpack.c.l.b16 %v102
    %v330 = vunpack.c.l.b16 %v103
    %v331 = vunpack.c.l.b16 %v104
    %v332 = vunpack.c.l.b16 %v105
    %v333 = vunpack.c.l.b16 %v106
    %v334 = vunpack.c.l.b16 %v107
    %v335 = vunpack.c.l.b16 %v108
    %v336 = vunpack.c.l.b16 %v109
    %v337 = vunpack.c.l.b16 %v110
    %v338 = vunpack.c.l.b16 %v111
    %v339 = vunpack.c.l.b16 %v112
    %v340 = vunpack.c.l.b16 %v113
    %v341 = vunpack.c.l.b16 %v114
    %v342 = vunpack.c.l.b16 %v115
    %v343 = vunpack.c.l.b16 %v116
    %v344 = vunpack.c.l.b16 %v117
    %v345 = vunpack.c.l.b16 %v118
    %v346 = vunpack.c.l.b16 %v119
    %v347 = vunpack.c.l.b16 %v120
    %v348 = vunpack.c.l.b16 %v121
    %v349 = vunpack.c.l.b16 %v122
    %v350 = vunpack.c.l.b16 %v123
    %v351 = vunpack.c.l.b16 %v124
    %v352 = vunpack.c.l.b16 %v125
    %v353 = vunpack.c.l.b16 %v126
    %v354 = vunpack.c.l.b16 %v127
    %v355 = vunpack.c.l.b16 %v128
    %v356 = vunpack.c.l.b16 %v129
    %v357 = vpack.c.b16 %v260, %v259
    %v358 = vpack.c.b16 %v262, %v261
    %v359 = vpack.c.b16 %v264, %v263
    %v360 = vpack.c.b16 %v266, %v265
    %v361 = vpack.c.b16 %v268, %v267
    %v362 = vpack.c.b16 %v270, %v269
    %v363 = vpack.c.b16 %v272, %v271
    %v364 = vpack.c.b16 %v274, %v273
    %v365 = vpack.c.b16 %v276, %v275
    %v366 = vpack.c.b16 %v278, %v277
    %v367 = vpack.c.b16 %v280, %v279
    %v368 = vpack.c.b16 %v282, %v281
    %v369 = vpack.c.b16 %v284, %v283
    %v370 = vpack.c.b16 %v286, %v285
    %v371 = vpack.c.b16 %v288, %v287
    %v372 = vpack.c.b16 %v290, %v289
    %v373 = vpack.c.b16 %v292, %v291
    %v374 = vpack.c.b16 %v294, %v293
    %v375 = vpack.c.b16 %v296, %v295
    %v376 = vpack.c.b16 %v298, %v297
    %v377 = vpack.c.b16 %v300, %v299
    %v378 = vpack.c.b16 %v302, %v301
    %v379 = vpack.c.b16 %v304, %v303
    %v380 = vpack.c.b16 %v306, %v305
    %v381 = vpack.c.b16 %v308, %v307
    %v382 = vpack.c.b16 %v310, %v309
    %v383 = vpack.c.b16 %v312, %v311
    %v384 = vpack.c.b16 %v314, %v313
    %v385 = vpack.c.b16 %v316, %v315
    %v386 = vpack.c.b16 %v318, %v317
    %v387 = vpack.c.b16 %v320, %v319
    %v388 = vpack.c.b16 %v322, %v321
    %v389 = vpack.c.b16 %v324, %v323
    %v390 = vpack.c.b16 %v326, %v325
    %v391 = vpack.c.b16 %v328, %v327
    %v392 = vpack.c.b16 %v330, %v329
    %v393 = vpack.c.b16 %v332, %v331
    %v394 = vpack.c.b16 %v334, %v333
    %v395 = vpack.c.b16 %v336, %v335
    %v396 = vpack.c.b16 %v338, %v337
    %v397 = vpack.c.b16 %v340, %v339
    %v398 = vpack.c.b16 %v342, %v341
    %v399 = vpack.c.b16 %v344, %v343
    %v400 = vpack.c.b16 %v346, %v345
    %v401 = vpack.c.b16 %v348, %v347
    %v402 = vpack.c.b16 %v350, %v349
    %v403 = vpack.c.b16 %v352, %v351
    %v404 = vpack.c.b16 %v354, %v353
    %v405 = vpack.c.b16 %v356, %v355
    %vm455 = vcmask 130048
    %v457 = vsel %vm455, %v154, 0
    %459 = vmatprep.subr.bf16.mxu0 0
    %460 = vmatpush1.bf16.msra.mxu0 %v357
    %461 = vmatprep.subr.bf16.mxu0 0
    %462 = vmatpush1.bf16.msra.mxu0 %v358
    %463 = vmatprep.subr.bf16.mxu0 0
    %464 = vmatpush1.bf16.msra.mxu0 %v359
    %465 = vmatprep.subr.bf16.mxu0 0
    %466 = vmatpush1.bf16.msra.mxu0 %v360
    %467 = vmatprep.subr.bf16.mxu0 0
    %468 = vmatpush1.bf16.msra.mxu0 %v361
    %469 = vmatprep.subr.bf16.mxu0 0
    %470 = vmatpush1.bf16.msra.mxu0 %v362
    %471 = vmatprep.subr.bf16.mxu0 0
    %472 = vmatpush1.bf16.msra.mxu0 %v363
    %473 = vmatprep.subr.bf16.mxu0 0
    %474 = vmatpush1.bf16.msra.mxu0 %v364
    %475 = vmatprep.subr.bf16.mxu0 0
    %476 = vmatpush1.bf16.msra.mxu0 %v365
    %477 = vmatprep.subr.bf16.mxu0 0
    %478 = vmatpush1.bf16.msra.mxu0 %v366
    %479 = vmatprep.subr.bf16.mxu0 0
    %480 = vmatpush1.bf16.msra.mxu0 %v367
    %481 = vmatprep.subr.bf16.mxu0 0
    %482 = vmatpush1.bf16.msra.mxu0 %v368
    %483 = vmatprep.subr.bf16.mxu0 0
    %484 = vmatpush1.bf16.msra.mxu0 %v369
    %485 = vmatprep.subr.bf16.mxu0 0
    %486 = vmatpush1.bf16.msra.mxu0 %v370
    %487 = vmatprep.subr.bf16.mxu0 0
    %488 = vmatpush1.bf16.msra.mxu0 %v371
    %489 = vmatprep.subr.bf16.mxu0 0
    %490 = vmatpush1.bf16.msra.mxu0 %v372
    %491 = vmatprep.mubr.bf16.mxu0 %v149
    %492 = vmatmul.mubr.bf16.gmra.mrb[0].mxu0 %v148
    %v493 = vpop.f32.mrb[0].mxu0
    %v494 = vadd.f32 %v135, %v493
    %v495 = vpop.f32.mrb[0].mxu0
    %v496 = vpop.f32.mrb[0].mxu0
    %v497 = vpop.f32.mrb[0].mxu0
    %498 = vdwg.mxu0
    %499 = vmatprep.subr.bf16.mxu0 0
    %500 = vmatpush1.bf16.msra.mxu0 %v373
    %501 = vmatprep.subr.bf16.mxu0 0
    %502 = vmatpush1.bf16.msra.mxu0 %v374
    %503 = vmatprep.subr.bf16.mxu0 0
    %504 = vmatpush1.bf16.msra.mxu0 %v375
    %505 = vmatprep.subr.bf16.mxu0 0
    %506 = vmatpush1.bf16.msra.mxu0 %v376
    %507 = vmatprep.subr.bf16.mxu0 0
    %508 = vmatpush1.bf16.msra.mxu0 %v377
    %509 = vmatprep.subr.bf16.mxu0 0
    %510 = vmatpush1.bf16.msra.mxu0 %v378
    %511 = vmatprep.subr.bf16.mxu0 0
    %512 = vmatpush1.bf16.msra.mxu0 %v379
    %513 = vmatprep.subr.bf16.mxu0 0
    %514 = vmatpush1.bf16.msra.mxu0 %v380
    %515 = vmatprep.subr.bf16.mxu0 0
    %516 = vmatpush1.bf16.msra.mxu0 %v381
    %517 = vmatprep.subr.bf16.mxu0 0
    %518 = vmatpush1.bf16.msra.mxu0 %v382
    %519 = vmatprep.subr.bf16.mxu0 0
    %520 = vmatpush1.bf16.msra.mxu0 %v383
    %521 = vmatprep.subr.bf16.mxu0 0
    %522 = vmatpush1.bf16.msra.mxu0 %v384
    %523 = vmatprep.subr.bf16.mxu0 0
    %524 = vmatpush1.bf16.msra.mxu0 %v385
    %525 = vmatprep.subr.bf16.mxu0 0
    %526 = vmatpush1.bf16.msra.mxu0 %v386
    %527 = vmatprep.subr.bf16.mxu0 0
    %528 = vmatpush1.bf16.msra.mxu0 %v387
    %529 = vmatprep.subr.bf16.mxu0 0
    %530 = vmatpush1.bf16.msra.mxu0 %v388
    %531 = vmatprep.mubr.bf16.mxu0 %v151
    %532 = vmatmul.mubr.bf16.gmra.mrb[0].mxu0 %v150
    %v533 = vpop.f32.mrb[0].mxu0
    %v534 = vadd.f32 %v494, %v533
    %v535 = vpop.f32.mrb[0].mxu0
    %v536 = vpop.f32.mrb[0].mxu0
    %v537 = vpop.f32.mrb[0].mxu0
    %538 = vdwg.mxu0
    %539 = vmatprep.subr.bf16.mxu0 0
    %540 = vmatpush1.bf16.msra.mxu0 %v389
    %541 = vmatprep.subr.bf16.mxu0 0
    %542 = vmatpush1.bf16.msra.mxu0 %v390
    %543 = vmatprep.subr.bf16.mxu0 0
    %544 = vmatpush1.bf16.msra.mxu0 %v391
    %545 = vmatprep.subr.bf16.mxu0 0
    %546 = vmatpush1.bf16.msra.mxu0 %v392
    %547 = vmatprep.subr.bf16.mxu0 0
    %548 = vmatpush1.bf16.msra.mxu0 %v393
    %549 = vmatprep.subr.bf16.mxu0 0
    %550 = vmatpush1.bf16.msra.mxu0 %v394
    %551 = vmatprep.subr.bf16.mxu0 0
    %552 = vmatpush1.bf16.msra.mxu0 %v395
    %553 = vmatprep.subr.bf16.mxu0 0
    %554 = vmatpush1.bf16.msra.mxu0 %v396
    %555 = vmatprep.subr.bf16.mxu0 0
    %556 = vmatpush1.bf16.msra.mxu0 %v397
    %557 = vmatprep.subr.bf16.mxu0 0
    %558 = vmatpush1.bf16.msra.mxu0 %v398
    %559 = vmatprep.subr.bf16.mxu0 0
    %560 = vmatpush1.bf16.msra.mxu0 %v399
    %561 = vmatprep.subr.bf16.mxu0 0
    %562 = vmatpush1.bf16.msra.mxu0 %v400
    %563 = vmatprep.subr.bf16.mxu0 0
    %564 = vmatpush1.bf16.msra.mxu0 %v401
    %565 = vmatprep.subr.bf16.mxu0 0
    %566 = vmatpush1.bf16.msra.mxu0 %v402
    %567 = vmatprep.subr.bf16.mxu0 0
    %568 = vmatpush1.bf16.msra.mxu0 %v403
    %569 = vmatprep.subr.bf16.mxu0 0
    %570 = vmatpush1.bf16.msra.mxu0 %v404
    %571 = vmatprep.mubr.bf16.mxu0 %v153
    %572 = vmatmul.mubr.bf16.gmra.mrb[0].mxu0 %v152
    %v573 = vpop.f32.mrb[0].mxu0
    %v574 = vadd.f32 %v534, %v573
    %v575 = vpop.f32.mrb[0].mxu0
    %v576 = vpop.f32.mrb[0].mxu0
    %v577 = vpop.f32.mrb[0].mxu0
    %578 = vdwg.mxu0
    %579 = vmatprep.subr.bf16.mxu0 0
    %580 = vmatpush1.bf16.msra.mxu0 %v405
    %581 = vmatprep.subr.bf16.mxu0 0
    %582 = vmatpush1.bf16.msra.mxu0 0
    %583 = vmatprep.subr.bf16.mxu0 0
    %584 = vmatpush1.bf16.msra.mxu0 0
    %585 = vmatprep.subr.bf16.mxu0 0
    %586 = vmatpush1.bf16.msra.mxu0 0
    %587 = vmatprep.subr.bf16.mxu0 0
    %588 = vmatpush1.bf16.msra.mxu0 0
    %589 = vmatprep.subr.bf16.mxu0 0
    %590 = vmatpush1.bf16.msra.mxu0 0
    %591 = vmatprep.subr.bf16.mxu0 0
    %592 = vmatpush1.bf16.msra.mxu0 0
    %593 = vmatprep.subr.bf16.mxu0 0
    %594 = vmatpush1.bf16.msra.mxu0 0
    %595 = vmatprep.subr.bf16.mxu0 0
    %596 = vmatpush1.bf16.msra.mxu0 0
    %597 = vmatprep.subr.bf16.mxu0 0
    %598 = vmatpush1.bf16.msra.mxu0 0
    %599 = vmatprep.subr.bf16.mxu0 0
    %600 = vmatpush1.bf16.msra.mxu0 0
    %601 = vmatprep.subr.bf16.mxu0 0
    %602 = vmatpush1.bf16.msra.mxu0 0
    %603 = vmatprep.subr.bf16.mxu0 0
    %604 = vmatpush1.bf16.msra.mxu0 0
    %605 = vmatprep.subr.bf16.mxu0 0
    %606 = vmatpush1.bf16.msra.mxu0 0
    %607 = vmatprep.subr.bf16.mxu0 0
    %608 = vmatpush1.bf16.msra.mxu0 0
    %609 = vmatprep.subr.bf16.mxu0 0
    %610 = vmatpush1.bf16.msra.mxu0 0
    %611 = vmatprep.mubr.bf16.mxu0 0
    %612 = vmatmul.mubr.bf16.gmra.mrb[0].mxu0 %v457
    %v613 = vpop.f32.mrb[0].mxu0
    %v614 = vadd.f32 %v574, %v613
    %v615 = vpop.f32.mrb[0].mxu0
    %v616 = vpop.f32.mrb[0].mxu0
    %v617 = vpop.f32.mrb[0].mxu0
    %618 = vdwg.mxu0
    %v619 = vtanh.pop %v614
    %v620 = vld [vmem:[%s3] sm:$0xff]
    %v621 = vld [vmem:[%s3 + $0x8] sm:$0xff]
    %v622 = vld [vmem:[%s3 + $0x10] sm:$0xff]
    %v623 = vld [vmem:[%s3 + $0x18] sm:$0xff]
    %v624 = vld [vmem:[%s3 + $0x20] sm:$0xff]
    %v625 = vld [vmem:[%s3 + $0x28] sm:$0xff]
    %v626 = vld [vmem:[%s3 + $0x30] sm:$0x3]
    %v627 = vld [vmem:[%s4] sm:$0x1]
    %v629 = vlaneseq
    %v630 = vshrl.u32 %v629, 7
    %v631 = vsub.s32 0, %v630
    %v632 = vrot.slane %v627, %v631
    %vm634 = vcmask 408576
    %v636 = vsel %vm634, %v619, 0
    %vm638 = vcmask 1041408
    %v640 = vsel %vm638, %v626, 0
    %642 = vmatprep.subr.mxu0 0.0
    %643 = vmatpush1.msra.mxu0 %v620
    %644 = vmatprep.subr.mxu0 0.0
    %645 = vmatpush1.msra.mxu0 %v621
    %646 = vmatprep.subr.mxu0 0.0
    %647 = vmatpush1.msra.mxu0 %v622
    %648 = vmatprep.subr.mxu0 0.0
    %649 = vmatpush1.msra.mxu0 %v623
    %650 = vmatprep.subr.mxu0 0.0
    %651 = vmatpush1.msra.mxu0 %v624
    %652 = vmatprep.subr.mxu0 0.0
    %653 = vmatpush1.msra.mxu0 %v625
    %654 = vmatprep.subr.mxu0 0.0
    %655 = vmatpush1.msra.mxu0 %v640
    %656 = vmatprep.subr.mxu0 0.0
    %657 = vmatpush1.msra.mxu0 0.0
    %658 = vmatprep.subr.mxu0 0.0
    %659 = vmatpush1.msra.mxu0 0.0
    %660 = vmatprep.subr.mxu0 0.0
    %661 = vmatpush1.msra.mxu0 0.0
    %662 = vmatprep.subr.mxu0 0.0
    %663 = vmatpush1.msra.mxu0 0.0
    %664 = vmatprep.subr.mxu0 0.0
    %665 = vmatpush1.msra.mxu0 0.0
    %666 = vmatprep.subr.mxu0 0.0
    %667 = vmatpush1.msra.mxu0 0.0
    %668 = vmatprep.subr.mxu0 0.0
    %669 = vmatpush1.msra.mxu0 0.0
    %670 = vmatprep.subr.mxu0 0.0
    %671 = vmatpush1.msra.mxu0 0.0
    %672 = vmatprep.subr.mxu0 0.0
    %673 = vmatpush1.msra.mxu0 0.0
    %674 = vmatprep.subr.mxu0 0.0
    %675 = vmatpush1.msra.mxu0 0.0
    %676 = vmatprep.subr.mxu0 0.0
    %677 = vmatpush1.msra.mxu0 0.0
    %678 = vmatprep.subr.mxu0 0.0
    %679 = vmatpush1.msra.mxu0 0.0
    %680 = vmatprep.subr.mxu0 0.0
    %681 = vmatpush1.msra.mxu0 0.0
    %682 = vmatprep.subr.mxu0 0.0
    %683 = vmatpush1.msra.mxu0 0.0
    %684 = vmatprep.subr.mxu0 0.0
    %685 = vmatpush1.msra.mxu0 0.0
    %686 = vmatprep.subr.mxu0 0.0
    %687 = vmatpush1.msra.mxu0 0.0
    %688 = vmatprep.subr.mxu0 0.0
    %689 = vmatpush1.msra.mxu0 0.0
    %690 = vmatprep.subr.mxu0 0.0
    %691 = vmatpush1.msra.mxu0 0.0
    %692 = vmatprep.subr.mxu0 0.0
    %693 = vmatpush1.msra.mxu0 0.0
    %694 = vmatprep.subr.mxu0 0.0
    %695 = vmatpush1.msra.mxu0 0.0
    %696 = vmatprep.subr.mxu0 0.0
    %697 = vmatpush1.msra.mxu0 0.0
    %698 = vmatprep.subr.mxu0 0.0
    %699 = vmatpush1.msra.mxu0 0.0
    %700 = vmatprep.subr.mxu0 0.0
    %701 = vmatpush1.msra.mxu0 0.0
    %702 = vmatprep.subr.mxu0 0.0
    %703 = vmatpush1.msra.mxu0 0.0
    %704 = vmatprep.subr.mxu0 0.0
    %705 = vmatpush1.msra.mxu0 0.0
    %706 = vmatprep.mubr.f32.mxu0 0.0
    %707 = vmatmul.mubr.f32.gmra.mrb[0].mxu0 %v636
    %v708 = vpop.f32.mrb[0].mxu0
    %v709 = vadd.f32 %v632, %v708
    %v710 = vpop.f32.mrb[0].mxu0
    %711 = vdwg.mxu0
    %v712 = vtanh.pop %v709
    %v713 = vld [vmem:[%s5] sm:$0xff]
    %v714 = vld [vmem:[%s5 + $0x8] sm:$0xff]
    %v715 = vld [vmem:[%s5 + $0x10] sm:$0xff]
    %v716 = vld [vmem:[%s5 + $0x18] sm:$0x1]
    %v717 = vld [vmem:[%s6] sm:$0x1]
    %v719 = vlaneseq
    %v720 = vshrl.u32 %v719, 7
    %v721 = vsub.s32 0, %v720
    %v722 = vrot.slane %v717, %v721
    %vm724 = vcmask 203776
    %v726 = vsel %vm724, %v712, 0
    %vm728 = vcmask 1040384
    %v730 = vsel %vm728, %v716, 0
    %732 = vmatprep.subr.mxu0 0.0
    %733 = vmatpush1.msra.mxu0 %v713
    %734 = vmatprep.subr.mxu0 0.0
    %735 = vmatpush1.msra.mxu0 %v714
    %736 = vmatprep.subr.mxu0 0.0
    %737 = vmatpush1.msra.mxu0 %v715
    %738 = vmatprep.subr.mxu0 0.0
    %739 = vmatpush1.msra.mxu0 %v730
    %740 = vmatprep.subr.mxu0 0.0
    %741 = vmatpush1.msra.mxu0 0.0
    %742 = vmatprep.subr.mxu0 0.0
    %743 = vmatpush1.msra.mxu0 0.0
    %744 = vmatprep.subr.mxu0 0.0
    %745 = vmatpush1.msra.mxu0 0.0
    %746 = vmatprep.subr.mxu0 0.0
    %747 = vmatpush1.msra.mxu0 0.0
    %748 = vmatprep.subr.mxu0 0.0
    %749 = vmatpush1.msra.mxu0 0.0
    %750 = vmatprep.subr.mxu0 0.0
    %751 = vmatpush1.msra.mxu0 0.0
    %752 = vmatprep.subr.mxu0 0.0
    %753 = vmatpush1.msra.mxu0 0.0
    %754 = vmatprep.subr.mxu0 0.0
    %755 = vmatpush1.msra.mxu0 0.0
    %756 = vmatprep.subr.mxu0 0.0
    %757 = vmatpush1.msra.mxu0 0.0
    %758 = vmatprep.subr.mxu0 0.0
    %759 = vmatpush1.msra.mxu0 0.0
    %760 = vmatprep.subr.mxu0 0.0
    %761 = vmatpush1.msra.mxu0 0.0
    %762 = vmatprep.subr.mxu0 0.0
    %763 = vmatpush1.msra.mxu0 0.0
    %764 = vmatprep.subr.mxu0 0.0
    %765 = vmatpush1.msra.mxu0 0.0
    %766 = vmatprep.subr.mxu0 0.0
    %767 = vmatpush1.msra.mxu0 0.0
    %768 = vmatprep.subr.mxu0 0.0
    %769 = vmatpush1.msra.mxu0 0.0
    %770 = vmatprep.subr.mxu0 0.0
    %771 = vmatpush1.msra.mxu0 0.0
    %772 = vmatprep.subr.mxu0 0.0
    %773 = vmatpush1.msra.mxu0 0.0
    %774 = vmatprep.subr.mxu0 0.0
    %775 = vmatpush1.msra.mxu0 0.0
    %776 = vmatprep.subr.mxu0 0.0
    %777 = vmatpush1.msra.mxu0 0.0
    %778 = vmatprep.subr.mxu0 0.0
    %779 = vmatpush1.msra.mxu0 0.0
    %780 = vmatprep.subr.mxu0 0.0
    %781 = vmatpush1.msra.mxu0 0.0
    %782 = vmatprep.subr.mxu0 0.0
    %783 = vmatpush1.msra.mxu0 0.0
    %784 = vmatprep.subr.mxu0 0.0
    %785 = vmatpush1.msra.mxu0 0.0
    %786 = vmatprep.subr.mxu0 0.0
    %787 = vmatpush1.msra.mxu0 0.0
    %788 = vmatprep.subr.mxu0 0.0
    %789 = vmatpush1.msra.mxu0 0.0
    %790 = vmatprep.subr.mxu0 0.0
    %791 = vmatpush1.msra.mxu0 0.0
    %792 = vmatprep.subr.mxu0 0.0
    %793 = vmatpush1.msra.mxu0 0.0
    %794 = vmatprep.subr.mxu0 0.0
    %795 = vmatpush1.msra.mxu0 0.0
    %796 = vmatprep.mubr.f32.mxu0 0.0
    %797 = vmatmul.mubr.f32.gmra.mrb[0].mxu0 %v726
    %v798 = vpop.f32.mrb[0].mxu0
    %v799 = vadd.f32 %v722, %v798
    %v800 = vpop.f32.mrb[0].mxu0
    %801 = vdwg.mxu0
    %v802 = vtanh.pop %v799
    %vm803 = vcmask 80896
    %v804 = vsel %vm803, %v802, -inf
    %805 = vmax.xlane.f32.xlu0 %v804
    %v806 = vpop.xlane.xlu0 %805
    %v807 = vsub.f32 %v802, %v806
    %v808 = vmul.f32 %v807, 1.442695
    %v809 = vpow.pop %v808
    %v810 = vsel %vm803, %v809, 0.0
    %811 = vadd.xlane.f32.xlu0 %v810
    %v812 = vpop.xlane.xlu0 %811
    %v813 = vlog2.pop %v812
    %v814 = vmul.f32 %v813, 0.6931472
    %v815 = vsub.f32 %v807, %v814
    %816 = vst.msk [vmem:[#allocation2] sm:$0xff] %vm803, %v815
    // Predicated region
    $region30: #{tpu_custom_call.1} parent=1 // pred_check
      _
    $region31: #{tpu_custom_call.1} parent=1 // pred_check_branch
      %818 = sbr.rel (0) target = $region33
    $region32: #{tpu_custom_call.1} parent=1 // pred_region
      %s820 = ssub.s32 128, 128
      %821 = vsyncadd [#allocation3], %s820
      %s823 = sshll.u32 [#allocation2], 4
      %s824 = int_to_ptr.vmem [resolvable:$true] %s823
      %826 = dma.vmem_to_hbm [thread:$0]  %s824, 128, %s7, [#allocation3]
    $region33: #{tpu_custom_call.1} parent=1 // pred_fallthru
      _
    // Predicated region
    $region34: #{tpu_custom_call.1} parent=1 // pred_check
      _
    $region35: #{tpu_custom_call.1} parent=1 // pred_check_branch
      %828 = sbr.rel (0) target = $region37
    $region36: #{tpu_custom_call.1} parent=1 // pred_region
      %829 = dma.done [#allocation3], 128
    $region37: #{tpu_custom_call.1} parent=1 // pred_fallthru
      _
    %830 = vsyncpa [#allocation3], 1

</llo_original>
